<compile_context>
chip_gen: v6e
topology: v6e:2x2x1
jax: 0.10.0
libtpu: 0.0.40
codegen_flags: <defaults>
</compile_context>

<pallas_src>
import jax
import jax.numpy as jnp
from jax import lax
from jax.experimental import pallas as pl
from jax.experimental.pallas import tpu as pltpu

IN_FEATURES = 12
OUT_FEATURES = 4
_LANES = 128


# ----------------------------------------------------------------------------
# Kernels
# ----------------------------------------------------------------------------
def _linear_kernel_feature_major(xt_ref, w_ref, b_ref, ot_ref):
    # xt: (12, TB) feature-major (batch on the 128-lane axis), w: (4, 12)
    # PyTorch layout, b: (4, 1).  Output (4, TB) is lane-dense over batch, so
    # stores and the writeback DMA are full-width.
    acc = lax.dot_general(
        w_ref[...], xt_ref[...],
        dimension_numbers=(((1,), (0,)), ((), ())),
        preferred_element_type=jnp.float32,
    )  # (4, TB), fp32 accumulation on the MXU
    ot_ref[...] = (acc + b_ref[...]).astype(ot_ref.dtype)


def _linear_kernel_batch_major(x_ref, w_ref, b_ref, o_ref):
    # Compatibility path.  x: (TB, 12), w: (4, 12), b: (1, 4) -> o: (TB, 4).
    # Contract x dim 1 with w dim 1 (== x @ w.T), fp32 accumulation.
    acc = lax.dot_general(
        x_ref[...], w_ref[...],
        dimension_numbers=(((1,), (1,)), ((), ())),
        preferred_element_type=jnp.float32,
    )  # (TB, 4)
    o_ref[...] = (acc + b_ref[...]).astype(o_ref.dtype)


def _round_down(x, m):
    return (x // m) * m


# ----------------------------------------------------------------------------
# Primary wrapper: feature-major (lane-dense) layout
# ----------------------------------------------------------------------------
def cascade_network_forward_feature_major(x_t, weight, bias, *, block_batch=32768):
    """Primary path: activations stay feature-major so the batch is lane-dense.

    x_t:    (12, B)  features on sublanes, batch on the 128-lane axis
    weight: (4, 12)  nn.Linear convention (NOT transposed by the wrapper)
    bias:   (4,)
    returns (4, B)   (== (x @ weight.T + bias).T)

    bf16 x_t/weight are supported and recommended on v6e/v7x (fp32 accum kept).
    """
    in_f, B = x_t.shape
    out_f = weight.shape[0]

    tb = min(block_batch, B)
    if tb < B:
        tb = _round_down(tb, _LANES)        # lane multiple when tiling
        if tb == 0:
            tb = B                          # too small to tile: untiled path
    elif B >= 4096:
        # Whole batch would be a single grid step; split in two so v7x's two
        # TensorCores both get work (harmless 1-TC generations: just 2 steps).
        tb = ((pl.cdiv(B, 2) + _LANES - 1) // _LANES) * _LANES

    b2 = bias.reshape(out_f, 1)

    return pl.pallas_call(
        _linear_kernel_feature_major,
        out_shape=jax.ShapeDtypeStruct((out_f, B), x_t.dtype),
        grid=(pl.cdiv(B, tb),),
        in_specs=[
            pl.BlockSpec((in_f, tb), lambda i: (0, i)),
            pl.BlockSpec((out_f, in_f), lambda i: (0, 0)),   # weight resident
            pl.BlockSpec((out_f, 1), lambda i: (0, 0)),       # bias resident
        ],
        out_specs=pl.BlockSpec((out_f, tb), lambda i: (0, i)),
        compiler_params=pltpu.CompilerParams(
            dimension_semantics=("parallel",)),
    )(x_t, weight, b2)


# ----------------------------------------------------------------------------
# Compatibility wrapper: strict PyTorch (B, 12) -> (B, 4) layout
# ----------------------------------------------------------------------------
def cascade_network_forward(x, weight, bias, *, block_batch=8192):
    """PyTorch-layout forward of Cascade_Network: x @ weight.T + bias.

    x:      (B, 12)
    weight: (4, 12)
    bias:   (4,)
    returns (B, 4)

    Prefer `cascade_network_forward_feature_major` when the surrounding code
    can keep activations feature-major: this layout pays 4/128-lane masked
    stores and ~10.7x lane-padded VMEM tiles.  Tile capped at 8192 rows so the
    padded double-buffered tiles stay well inside v7x's 64 MiB VMEM.
    """
    B, in_f = x.shape
    out_f = weight.shape[0]

    itemsize = jnp.dtype(x.dtype).itemsize
    sublane = max(8, 32 // max(1, itemsize))    # fp32: 8, bf16: 16, int8/fp8: 32

    tb = min(block_batch, B)
    if tb < B:
        tb = _round_down(tb, sublane)
        if tb == 0:
            tb = B                              # too small to tile: untiled path

    b2 = bias.reshape(1, out_f)

    return pl.pallas_call(
        _linear_kernel_batch_major,
        out_shape=jax.ShapeDtypeStruct((B, out_f), x.dtype),
        grid=(pl.cdiv(B, tb),),
        in_specs=[
            pl.BlockSpec((tb, in_f), lambda i: (i, 0)),
            pl.BlockSpec((out_f, in_f), lambda i: (0, 0)),
            pl.BlockSpec((1, out_f), lambda i: (0, 0)),
        ],
        out_specs=pl.BlockSpec((tb, out_f), lambda i: (i, 0)),
        compiler_params=pltpu.CompilerParams(
            dimension_semantics=("parallel",),
            vmem_limit_bytes=32 * 1024 * 1024,   # covers v5e's 16 MiB scoped default
        ),
    )(x, weight, b2)


# ----------------------------------------------------------------------------
# Demo / correctness check
# ----------------------------------------------------------------------------
if __name__ == "__main__":
    key = jax.random.PRNGKey(0)
    kx, kw, kb = jax.random.split(key, 3)

    B = 256

    # Deterministic "synthetic checkpoint": mimic nn.Linear default init range.
    bound = (1.0 / IN_FEATURES) ** 0.5
    x = jax.random.normal(kx, (B, IN_FEATURES), dtype=jnp.float32)
    weight = jax.random.uniform(kw, (OUT_FEATURES, IN_FEATURES),
                                minval=-bound, maxval=bound, dtype=jnp.float32)
    bias = jax.random.uniform(kb, (OUT_FEATURES,),
                              minval=-bound, maxval=bound, dtype=jnp.float32)

    ref = x @ weight.T + bias

    # Primary (lane-dense, feature-major) path; block_batch=128 exercises a
    # multi-step "parallel" grid (grid=(2,)).
    out_fm = cascade_network_forward_feature_major(x.T, weight, bias,
                                                   block_batch=128)
    out_fm = jax.block_until_ready(out_fm)
    assert out_fm.shape == (OUT_FEATURES, B)
    assert jnp.allclose(out_fm.T, ref, atol=1e-5, rtol=1e-5)

    # PyTorch-layout compatibility path.
    out_bm = cascade_network_forward(x, weight, bias, block_batch=128)
    out_bm = jax.block_until_ready(out_bm)
    assert out_bm.shape == (B, OUT_FEATURES)
    assert jnp.allclose(out_bm, ref, atol=1e-5, rtol=1e-5)

    # bf16 at the call boundary (recommended on v6e/v7x); fp32 accumulation
    # in-kernel, bf16 output -> compare with loose tolerance.
    out_bf16 = cascade_network_forward_feature_major(
        x.T.astype(jnp.bfloat16), weight.astype(jnp.bfloat16), bias,
        block_batch=128)
    out_bf16 = jax.block_until_ready(out_bf16)
    assert out_bf16.dtype == jnp.bfloat16
    assert jnp.allclose(out_bf16.T.astype(jnp.float32), ref,
                        atol=6e-2, rtol=6e-2)

    print("KERNEL_OK")
</pallas_src>

<mosaic_0001>
module attributes {stable_mosaic.version = 11 : i64} {
  func.func @_linear_kernel_feature_major(%arg0: i32, %arg1: memref<12x128xf32, #tpu.memory_space<vmem>>, %arg2: memref<4x12xf32, #tpu.memory_space<vmem>>, %arg3: memref<4x1xf32, #tpu.memory_space<vmem>>, %arg4: memref<4x128xf32, #tpu.memory_space<vmem>>) attributes {dimension_semantics = [#tpu.dimension_semantics<parallel>], iteration_bounds = array<i64: 2>, scalar_prefetch = 0 : i64, scratch_operands = 0 : i64, tpu.core_type = #tpu.core_type<tc>, window_params = [{transform_indices = @transform_0, window_bounds = array<i64: 12, 128>}, {pipeline_mode = #tpu.pipeline_mode<synchronous>, transform_indices = @transform_1, window_bounds = array<i64: 4, 12>}, {pipeline_mode = #tpu.pipeline_mode<synchronous>, transform_indices = @transform_2, window_bounds = array<i64: 4, 1>}, {transform_indices = @transform_3, window_bounds = array<i64: 4, 128>}]} {
    %c0 = arith.constant 0 : index
    %c0_0 = arith.constant 0 : index
    %0 = vector.load %arg2[%c0, %c0_0] : memref<4x12xf32, #tpu.memory_space<vmem>>, vector<4x12xf32>
    %c0_1 = arith.constant 0 : index
    %c0_2 = arith.constant 0 : index
    %1 = vector.load %arg1[%c0_1, %c0_2] : memref<12x128xf32, #tpu.memory_space<vmem>>, vector<12x128xf32>
    %cst = arith.constant dense<0.000000e+00> : vector<4x128xf32>
    %2 = tpu.matmul %0, %1, %cst {dimension_numbers = #tpu.dot_dimension_numbers<[1], [0], [0], [1], [0, 0, 1, 1], [], []>} : vector<4x12xf32>, vector<12x128xf32>, vector<4x128xf32> -> vector<4x128xf32>
    %c0_3 = arith.constant 0 : index
    %c0_4 = arith.constant 0 : index
    %3 = vector.load %arg3[%c0_3, %c0_4] : memref<4x1xf32, #tpu.memory_space<vmem>>, vector<4x1xf32>
    %4 = vector.broadcast %3 : vector<4x1xf32> to vector<4x128xf32>
    %5 = arith.addf %2, %4 : vector<4x128xf32>
    %c0_5 = arith.constant 0 : index
    %c0_6 = arith.constant 0 : index
    %6 = vector.load %arg4[%c0_5, %c0_6] : memref<4x128xf32, #tpu.memory_space<vmem>>, vector<4x128xf32>
    tpu.vector_store %arg4[%c0_5, %c0_6], %5 {strides = array<i32>} : memref<4x128xf32, #tpu.memory_space<vmem>>, vector<4x128xf32>,
    return
  }
  func.func @transform_0(%arg0: i32) -> (i32, i32) {
    %c0_i32 = arith.constant 0 : i32
    %c0_i32_0 = arith.constant 0 : i32
    return %c0_i32, %arg0 : i32, i32
  }
  func.func @transform_1(%arg0: i32) -> (i32, i32) {
    %c0_i32 = arith.constant 0 : i32
    %c0_i32_0 = arith.constant 0 : i32
    %c0_i32_1 = arith.constant 0 : i32
    return %c0_i32, %c0_i32_0 : i32, i32
  }
  func.func @transform_2(%arg0: i32) -> (i32, i32) {
    %c0_i32 = arith.constant 0 : i32
    %c0_i32_0 = arith.constant 0 : i32
    %c0_i32_1 = arith.constant 0 : i32
    return %c0_i32, %c0_i32_0 : i32, i32
  }
  func.func @transform_3(%arg0: i32) -> (i32, i32) {
    %c0_i32 = arith.constant 0 : i32
    %c0_i32_0 = arith.constant 0 : i32
    return %c0_i32, %arg0 : i32, i32
  }
}

</mosaic_0001>

<llo_original>
// kernel: tpu_custom_call.1
$region0: #{tpu_custom_call.1}
  #allocation0 [shape = 'u32[]', space=smem, size = 0x4, offset = 0x4, fixed_abs, tag = 'smem constant byte address 0x4 - core index']
  #allocation1 [shape = 'u32[144,128]{1,0:T(1,128)}', space=vmem, size = 0x12000, scoped, tag = 'internal scratch']
  %s0 = inlined_call_operand.hbm [shape: f32[12,256], index: 0, kind: input, shape index: {}]
  %s1 = inlined_call_operand.vmem [shape: f32[4,12], index: 1, kind: input, shape index: {}]
  %s2 = inlined_call_operand.vmem [shape: f32[4,1], index: 2, kind: input, shape index: {}]
  %s3 = inlined_call_operand.hbm [shape: f32[4,256], index: 3, kind: output, shape index: {}]
  %s4 = sld [smem:[#allocation0]]
  $region49: #{tpu_custom_call.1} parent=0
    _
  %s6 = ssub.s32 1, %s4
  %s7 = scalar_select 0, %s6, %s4
  $region1: #{tpu_custom_call.1} parent=0
    #allocation2 [shape = 'u8[16384]{0}', space=vmem, size = 0x4000, scoped, tag = 'input window, operand 0']
    #allocation3 [shape = 's32[2]{0}', space=sflag, size = 0x8, scoped, tag = 'scoped memory for tpu_custom_call.1']
    #allocation4 [shape = 's32[2]{0}', space=sflag, size = 0x8, scoped, tag = 'scoped memory for tpu_custom_call.1']
    #allocation5 [shape = 'u8[4096]{0}', space=vmem, size = 0x1000, scoped, tag = 'output window, operand 0']
    %8 = vsyncpa [#allocation3], 0
    %s9 = scalar_lea.sflag [#allocation3], 1
    %10 = vsyncpa %s9, 0
    %11 = vsyncpa [#allocation4], 0
    %s12 = scalar_lea.sflag [#allocation4], 1
    %13 = vsyncpa %s12, 0
    loop: start=0, step=1, limit=4
    $region2: #{tpu_custom_call.1} parent=1 // loop_pre_header
      _
    $region3: #{tpu_custom_call.1} parent=1 // loop_header
      %s15 = sphi 0, %s19
      %p16 = scmp.ge.s32.totalorder %s15, 4
      %s25 = sphi 0, %s27
      %s28 = sphi 0, %s25
      %s29 = sphi 0, %s28
      %s45 = sphi 0, %s29
      %s49 = sphi 0, %s49
      %s51 = sphi 0, %s49
      %s52 = sphi 0, %s51
      %s66 = sphi 0, %s52
      %s70 = sphi 0, %s70
      %s72 = sphi 0, %s70
      %s73 = sphi 0, %s72
      %s87 = sphi 0, %s73
      %s93 = sphi 0, %s95
      %s96 = sphi 0, %s93
      %s97 = sphi 0, %s96
      %s113 = sphi 0, %s97
    $region4: #{tpu_custom_call.1} parent=1 // loop_header_branch
      %18 = sbr.rel (%p16) target = $region8
    $region5: #{tpu_custom_call.1} parent=1 // loop_body
      %s20 = ssub.s32 %s15, 1
      %s21 = ssub.s32 %s15, 2
      %s22 = sadd.s32 %s15, 1
      %s23 = ssub.s32 %s15, %s22
      %p24 = scmp.eq.s32.totalorder %s23, 0
      %s26 = sadd.s32 %s25, 1
      %s27 = scalar_select %p24, %s25, %s26
      %p30 = pneg %p24
      %p31 = scmp.eq.s32.totalorder %s15, 1
      %p32 = por %p30, %p31
      %p33 = scmp.ne.s32.totalorder %s25, %s28
      %p34 = scmp.eq.s32.totalorder %s15, 0
      %p35 = por %p33, %p34
      %p36 = scmp.ne.s32.totalorder %s25, %s28
      %p37 = scmp.eq.s32.totalorder %s20, 1
      %p38 = por %p36, %p37
      %p39 = scmp.ne.s32.totalorder %s28, %s29
      %p40 = scmp.eq.s32.totalorder %s20, 0
      %p41 = por %p39, %p40
      %p42 = scmp.ne.s32.totalorder %s28, %s29
      %p43 = scmp.eq.s32.totalorder %s21, 1
      %p44 = por %p42, %p43
      %p46 = scmp.ne.s32.totalorder %s29, %s45
      %p47 = scmp.eq.s32.totalorder %s21, 0
      %p48 = por %p46, %p47
      %s50 = sadd.s32 %s49, 1
      %p53 = scmp.eq.s32.totalorder %s15, 1
      %p54 = scmp.ne.s32.totalorder %s49, %s51
      %p55 = scmp.eq.s32.totalorder %s15, 0
      %p56 = por %p54, %p55
      %p57 = scmp.ne.s32.totalorder %s49, %s51
      %p58 = scmp.eq.s32.totalorder %s20, 1
      %p59 = por %p57, %p58
      %p60 = scmp.ne.s32.totalorder %s51, %s52
      %p61 = scmp.eq.s32.totalorder %s20, 0
      %p62 = por %p60, %p61
      %p63 = scmp.ne.s32.totalorder %s51, %s52
      %p64 = scmp.eq.s32.totalorder %s21, 1
      %p65 = por %p63, %p64
      %p67 = scmp.ne.s32.totalorder %s52, %s66
      %p68 = scmp.eq.s32.totalorder %s21, 0
      %p69 = por %p67, %p68
      %s71 = sadd.s32 %s70, 1
      %p74 = scmp.eq.s32.totalorder %s15, 1
      %p75 = scmp.ne.s32.totalorder %s70, %s72
      %p76 = scmp.eq.s32.totalorder %s15, 0
      %p77 = por %p75, %p76
      %p78 = scmp.ne.s32.totalorder %s70, %s72
      %p79 = scmp.eq.s32.totalorder %s20, 1
      %p80 = por %p78, %p79
      %p81 = scmp.ne.s32.totalorder %s72, %s73
      %p82 = scmp.eq.s32.totalorder %s20, 0
      %p83 = por %p81, %p82
      %p84 = scmp.ne.s32.totalorder %s72, %s73
      %p85 = scmp.eq.s32.totalorder %s21, 1
      %p86 = por %p84, %p85
      %p88 = scmp.ne.s32.totalorder %s73, %s87
      %p89 = scmp.eq.s32.totalorder %s21, 0
      %p90 = por %p88, %p89
      %s91 = ssub.s32 %s15, %s22
      %p92 = scmp.eq.s32.totalorder %s91, 0
      %s94 = sadd.s32 %s93, 1
      %s95 = scalar_select %p92, %s93, %s94
      %p98 = pneg %p92
      %p99 = scmp.eq.s32.totalorder %s15, 1
      %p100 = por %p98, %p99
      %p101 = scmp.ne.s32.totalorder %s93, %s96
      %p102 = scmp.eq.s32.totalorder %s15, 0
      %p103 = por %p101, %p102
      %p104 = scmp.ne.s32.totalorder %s93, %s96
      %p105 = scmp.eq.s32.totalorder %s20, 1
      %p106 = por %p104, %p105
      %p107 = scmp.ne.s32.totalorder %s96, %s97
      %p108 = scmp.eq.s32.totalorder %s20, 0
      %p109 = por %p107, %p108
      %p110 = scmp.ne.s32.totalorder %s96, %s97
      %p111 = scmp.eq.s32.totalorder %s21, 1
      %p112 = por %p110, %p111
      %p114 = scmp.ne.s32.totalorder %s97, %s113
      %p115 = scmp.eq.s32.totalorder %s21, 0
      %p116 = por %p114, %p115
      %p117 = scmp.le.s32.totalorder 1, %s15
      %p118 = scmp.lt.s32.totalorder %s15, 3
      %p119 = pnand %p117, %p118
      %p120 = pneg %p119
      // Predicated region
      $region9: #{tpu_custom_call.1} parent=5 // pred_check
        _
      $region10: #{tpu_custom_call.1} parent=5 // pred_check_branch
        %122 = sbr.rel (%p119) target = $region12
      $region11: #{tpu_custom_call.1} parent=5 // pred_region
        %s123 = ssub.s32 %s15, 1
        // Predicated region
        $region13: #{tpu_custom_call.1} parent=11 // pred_check
          %p124 = pneg %p62
        $region14: #{tpu_custom_call.1} parent=11 // pred_check_branch
          %126 = sbr.rel (%p124) target = $region16
        $region15: #{tpu_custom_call.1} parent=11 // pred_region
          _
        $region16: #{tpu_custom_call.1} parent=11 // pred_fallthru
          _
        // Predicated region
        $region17: #{tpu_custom_call.1} parent=11 // pred_check
          %p127 = pneg %p83
        $region18: #{tpu_custom_call.1} parent=11 // pred_check_branch
          %129 = sbr.rel (%p127) target = $region20
        $region19: #{tpu_custom_call.1} parent=11 // pred_region
          _
        $region20: #{tpu_custom_call.1} parent=11 // pred_fallthru
          _
      $region12: #{tpu_custom_call.1} parent=5 // pred_fallthru
        _
      %p130 = scmp.lt.s32.totalorder %s15, 2
      // Predicated region
      $region21: #{tpu_custom_call.1} parent=5 // pred_check
        %p131 = pneg %p130
      $region22: #{tpu_custom_call.1} parent=5 // pred_check_branch
        %133 = sbr.rel (%p131) target = $region24
      $region23: #{tpu_custom_call.1} parent=5 // pred_region
        // Predicated region
        $region25: #{tpu_custom_call.1} parent=23 // pred_check
          %p134 = pneg %p35
        $region26: #{tpu_custom_call.1} parent=23 // pred_check_branch
          %136 = sbr.rel (%p134) target = $region28
        $region27: #{tpu_custom_call.1} parent=23 // pred_region
          %s137 = sand.u32 %s25, 1
          %s138 = scalar_lea.sflag [#allocation3], %s137
          %s139 = sand.u32 %s25, 1
          %s140 = smul.addr %s139, 16
          %s141 = scalar_lea.vmem [#allocation2], %s140
          %s143 = ssub.s32 256, 256
          %144 = vsyncadd %s138, %s143
          %s145 = smul.addr %s15, 128
          %s146 = scalar_lea.hbm %s0, %s145
          %s147 = sshll.u32 %s141, 4
          %s148 = int_to_ptr.vmem [resolvable:$true] %s147
          %153 = dma.hbm_to_vmem [thread:$0]  %s146, 256, %s148, %s138, 256, 128, 8
        $region28: #{tpu_custom_call.1} parent=23 // pred_fallthru
          _
      $region24: #{tpu_custom_call.1} parent=5 // pred_fallthru
        _
      %p154 = scmp.le.s32.totalorder 1, %s15
      %p155 = scmp.lt.s32.totalorder %s15, 3
      %p156 = pnand %p154, %p155
      %p157 = pneg %p156
      // Predicated region
      $region29: #{tpu_custom_call.1} parent=5 // pred_check
        _
      $region30: #{tpu_custom_call.1} parent=5 // pred_check_branch
        %159 = sbr.rel (%p156) target = $region32
      $region31: #{tpu_custom_call.1} parent=5 // pred_region
        %s160 = ssub.s32 %s15, 1
        %s161 = sand.u32 %s28, 1
        %s162 = scalar_lea.sflag [#allocation3], %s161
        %s163 = sand.u32 %s28, 1
        %s164 = smul.addr %s163, 16
        %s165 = scalar_lea.vmem [#allocation2], %s164
        // Predicated region
        $region33: #{tpu_custom_call.1} parent=31 // pred_check
          %p166 = pneg %p41
        $region34: #{tpu_custom_call.1} parent=31 // pred_check_branch
          %168 = sbr.rel (%p166) target = $region36
        $region35: #{tpu_custom_call.1} parent=31 // pred_region
          %169 = dma.done %s162, 256
        $region36: #{tpu_custom_call.1} parent=31 // pred_fallthru
          _
        %s170 = sand.u32 %s28, 1
        %s171 = scalar_lea.sflag [#allocation3], %s170
        %s172 = sand.u32 %s28, 1
        %s173 = smul.addr %s172, 16
        %s174 = scalar_lea.vmem [#allocation2], %s173
        %p175 = pneg %p41
        %p176 = pneg %p38
        %p177 = pneg %p62
        %p178 = pneg %p59
        %p179 = pneg %p83
        %p180 = pneg %p80
        %p181 = pneg %p109
        %p182 = pneg %p106
        %s183 = sand.u32 %s96, 1
        %s184 = scalar_lea.sflag [#allocation4], %s183
        %s185 = sand.u32 %s96, 1
        %s186 = smul.addr %s185, 4
        %s187 = scalar_lea.vmem [#allocation5], %s186
        %v188 = vld [vmem:[%s1] sm:$0xf]
        %v189 = vld [vmem:[%s165] sm:$0xff]
        %v190 = vld [vmem:[%s165 + $0x8] sm:$0xf]
        %v191 = vld [vmem:[%s2] sm:$0xf]
        %193 = vset.pattern.permute.xlu0 0
        %194 = vperm.xlu0 %193, %v191
        %v195 = vpop.permute.xlu0 %194
        %vm197 = vcmask 97280
        %v199 = vsel %vm197, %v188, 0
        %vm201 = vcmask 1043456
        %v203 = vsel %vm201, %v190, 0
        %205 = vmatprep.subr.mxu0 0.0
        %206 = vmatpush1.msra.mxu0 0.0
        %207 = vmatprep.subr.mxu0 0.0
        %208 = vmatpush1.msra.mxu0 0.0
        %209 = vmatprep.subr.mxu0 0.0
        %210 = vmatpush1.msra.mxu0 0.0
        %211 = vmatprep.subr.mxu0 0.0
        %212 = vmatpush1.msra.mxu0 0.0
        %213 = vmatprep.subr.mxu0 0.0
        %214 = vmatpush1.msra.mxu0 0.0
        %215 = vmatprep.subr.mxu0 0.0
        %216 = vmatpush1.msra.mxu0 0.0
        %217 = vmatprep.subr.mxu0 0.0
        %218 = vmatpush1.msra.mxu0 0.0
        %219 = vmatprep.subr.mxu0 0.0
        %220 = vmatpush1.msra.mxu0 0.0
        %221 = vmatprep.subr.mxu0 0.0
        %222 = vmatpush1.msra.mxu0 0.0
        %223 = vmatprep.subr.mxu0 0.0
        %224 = vmatpush1.msra.mxu0 0.0
        %225 = vmatprep.subr.mxu0 0.0
        %226 = vmatpush1.msra.mxu0 0.0
        %227 = vmatprep.subr.mxu0 0.0
        %228 = vmatpush1.msra.mxu0 0.0
        %229 = vmatprep.subr.mxu0 0.0
        %230 = vmatpush1.msra.mxu0 0.0
        %231 = vmatprep.subr.mxu0 0.0
        %232 = vmatpush1.msra.mxu0 0.0
        %233 = vmatprep.subr.mxu0 0.0
        %234 = vmatpush1.msra.mxu0 %v203
        %235 = vmatprep.subr.mxu0 0.0
        %236 = vmatpush1.msra.mxu0 %v189
        %237 = vmatprep.subr.mxu0 0.0
        %238 = vmatpush2.msra.mxu0 0.0
        %239 = vmatprep.subr.mxu0 0.0
        %240 = vmatpush2.msra.mxu0 0.0
        %241 = vmatprep.subr.mxu0 0.0
        %242 = vmatpush2.msra.mxu0 0.0
        %243 = vmatprep.subr.mxu0 0.0
        %244 = vmatpush2.msra.mxu0 0.0
        %245 = vmatprep.subr.mxu0 0.0
        %246 = vmatpush2.msra.mxu0 0.0
        %247 = vmatprep.subr.mxu0 0.0
        %248 = vmatpush2.msra.mxu0 0.0
        %249 = vmatprep.subr.mxu0 0.0
        %250 = vmatpush2.msra.mxu0 0.0
        %251 = vmatprep.subr.mxu0 0.0
        %252 = vmatpush2.msra.mxu0 0.0
        %253 = vmatprep.subr.mxu0 0.0
        %254 = vmatpush2.msra.mxu0 0.0
        %255 = vmatprep.subr.mxu0 0.0
        %256 = vmatpush2.msra.mxu0 0.0
        %257 = vmatprep.subr.mxu0 0.0
        %258 = vmatpush2.msra.mxu0 0.0
        %259 = vmatprep.subr.mxu0 0.0
        %260 = vmatpush2.msra.mxu0 0.0
        %261 = vmatprep.subr.mxu0 0.0
        %262 = vmatpush2.msra.mxu0 0.0
        %263 = vmatprep.subr.mxu0 0.0
        %264 = vmatpush2.msra.mxu0 0.0
        %265 = vmatprep.subr.mxu0 0.0
        %266 = vmatpush2.msra.mxu0 0.0
        %267 = vmatprep.subr.mxu0 0.0
        %268 = vmatpush2.msra.mxu0 0.0
        %269 = vmatprep.mubr.f32.mxu0 0.0
        %270 = vmatmul.mubr.f32.gmra.mxu0 %v199
        %v271 = vpop.f32.mrf.mxu0
        %v272 = vadd.f32 %v195, %v271
        %v273 = vpop.f32.mrf.mxu0
        %274 = vdwg.mxu0
        %275 = vst [vmem:[%s187] sm:$0xf] %v272
        %s276 = sand.u32 %s96, 1
        %s277 = scalar_lea.sflag [#allocation4], %s276
        %s278 = sand.u32 %s96, 1
        %s279 = smul.addr %s278, 4
        %s280 = scalar_lea.vmem [#allocation5], %s279
        // Predicated region
        $region37: #{tpu_custom_call.1} parent=31 // pred_check
          %p281 = pneg %p106
        $region38: #{tpu_custom_call.1} parent=31 // pred_check_branch
          %283 = sbr.rel (%p281) target = $region40
        $region39: #{tpu_custom_call.1} parent=31 // pred_region
          %s285 = ssub.s32 64, 64
          %286 = vsyncadd %s277, %s285
          %s287 = smul.addr %s20, 64
          %s288 = scalar_lea.hbm %s3, %s287
          %s290 = sshll.u32 %s280, 4
          %s291 = int_to_ptr.vmem [resolvable:$true] %s290
          %293 = dma.vmem_to_hbm [thread:$0]  %s291, 64, %s288, %s277
        $region40: #{tpu_custom_call.1} parent=31 // pred_fallthru
          _
      $region32: #{tpu_custom_call.1} parent=5 // pred_fallthru
        _
      %p294 = scmp.le.s32.totalorder 2, %s15
      // Predicated region
      $region41: #{tpu_custom_call.1} parent=5 // pred_check
        %p295 = pneg %p294
      $region42: #{tpu_custom_call.1} parent=5 // pred_check_branch
        %297 = sbr.rel (%p295) target = $region44
      $region43: #{tpu_custom_call.1} parent=5 // pred_region
        %s298 = ssub.s32 %s15, 2
        // Predicated region
        $region45: #{tpu_custom_call.1} parent=43 // pred_check
          %p299 = pneg %p112
        $region46: #{tpu_custom_call.1} parent=43 // pred_check_branch
          %301 = sbr.rel (%p299) target = $region48
        $region47: #{tpu_custom_call.1} parent=43 // pred_region
          %s302 = sand.u32 %s97, 1
          %s303 = scalar_lea.sflag [#allocation4], %s302
          %s304 = sand.u32 %s97, 1
          %s305 = smul.addr %s304, 4
          %s306 = scalar_lea.vmem [#allocation5], %s305
          %307 = dma.done %s303, 64
        $region48: #{tpu_custom_call.1} parent=43 // pred_fallthru
          _
      $region44: #{tpu_custom_call.1} parent=5 // pred_fallthru
        _
    $region6: #{tpu_custom_call.1} parent=1 // loop_footer
      %s19 = sadd.s32 1, %s15
    $region7: #{tpu_custom_call.1} parent=1 // loop_footer_branch
      %14 = sbr.rel target = $region3
    $region8: #{tpu_custom_call.1} parent=1 // loop_exit
      _
    %308 = vsyncpa [#allocation3], 1
    %s309 = scalar_lea.sflag [#allocation3], 1
    %310 = vsyncpa %s309, 1
    %311 = vsyncpa [#allocation4], 1
    %s312 = scalar_lea.sflag [#allocation4], 1
    %313 = vsyncpa %s312, 1

</llo_original>
